<compile_context>
chip_gen: v6e
topology: v6e:2x2x1
jax: 0.10.0
libtpu: 0.0.40
codegen_flags: <defaults>
</compile_context>

<pallas_src>
import functools

import jax
import jax.numpy as jnp
from jax import lax
from jax.experimental import pallas as pl
from jax.experimental.pallas import tpu as pltpu

LN_EPS = 1e-5
IGNORE_ID = -1

_VMEM_TILE_BUDGET = 32 * 1024 * 1024   # double-buffered tile footprint budget
_VMEM_LIMIT_BYTES = 48 * 1024 * 1024   # scoped VMEM limit passed to Mosaic
_ROW_TILE_TARGET = 1024


def _weighted_sum_kernel(w_ref, a_ref, t_ref, o_ref, *, normalize):
    # w_ref: (2,) softmax-normalized weights in SMEM
    # a_ref, t_ref, o_ref: (row_tile, C) tiles in VMEM
    w0 = w_ref[0]
    w1 = w_ref[1]

    a = a_ref[...].astype(jnp.float32)
    t = t_ref[...].astype(jnp.float32)

    if normalize:
        def layer_norm(x):
            mu = jnp.mean(x, axis=-1, keepdims=True)
            xc = x - mu
            var = jnp.mean(xc * xc, axis=-1, keepdims=True)  # biased var (PyTorch)
            return xc * lax.rsqrt(var + LN_EPS)

        a = layer_norm(a)
        t = layer_norm(t)

    o_ref[...] = (w0 * a + w1 * t).astype(o_ref.dtype)


@functools.partial(jax.jit, static_argnames=("normalize",))
def weighted_sum_forward(weights, audio_token_encoded, audio_token_len,
                         text_token_encoded, text_token_len, normalize=True):
    """Pallas implementation of WeightedSum.forward.

    Args:
      weights:              (2,) raw trainable weights (pre-softmax)
      audio_token_encoded:  (B, T, C)
      audio_token_len:      (B,)
      text_token_encoded:   (B, T, C)
      text_token_len:       (B,)
    Returns:
      (audio_text_token_encoded (B, T, C), audio_text_token_len (B,))
    """
    assert audio_token_encoded.shape == text_token_encoded.shape
    B, T, C = audio_token_encoded.shape
    dtype = audio_token_encoded.dtype

    # TODO(synk): the PyTorch module asserts audio_token_len == text_token_len
    # at runtime; not representable as a host assert on traced values here.

    # Parameter glue: 2-element softmax (matches F.softmax(self.weights, 0)).
    w = jax.nn.softmax(weights.astype(jnp.float32), axis=0)

    rows = B * T
    a2 = audio_token_encoded.reshape(rows, C)   # free reshape (contiguous)
    t2 = text_token_encoded.reshape(rows, C)

    itemsize = jnp.dtype(dtype).itemsize
    sublane = {4: 8, 2: 16, 1: 32}.get(itemsize, 8)

    # Row-tile selection: target a large tile (HBM-bandwidth bound), halve only
    # if the double-buffered footprint (2 inputs + 1 output, 2 buffers each)
    # would exceed the VMEM budget.  Tile stays a multiple of the sublane pack.
    row_tile = _ROW_TILE_TARGET
    bytes_per_row = 3 * 2 * C * itemsize
    while row_tile > sublane and row_tile * bytes_per_row > _VMEM_TILE_BUDGET:
        row_tile //= 2
    row_tile = max(row_tile, sublane)

    if rows <= row_tile:
        # Single full-array block: exempt from the (8,128) divisibility rule.
        row_tile = rows
        grid = (1,)
    else:
        # cdiv grid: last partial block is boundary-masked by Pallas; no
        # wrapper-side padding copy of the inputs is needed.
        grid = (pl.cdiv(rows, row_tile),)

    cost = pl.CostEstimate(
        flops=12 * rows * C,
        transcendentals=2 * rows,
        bytes_accessed=3 * rows * C * itemsize,
    )

    kernel = functools.partial(_weighted_sum_kernel, normalize=normalize)

    out2 = pl.pallas_call(
        kernel,
        out_shape=jax.ShapeDtypeStruct((rows, C), dtype),
        grid_spec=pltpu.PrefetchScalarGridSpec(
            num_scalar_prefetch=0,
            grid=grid,
            in_specs=[
                pl.BlockSpec(memory_space=pltpu.MemorySpace.SMEM),    # weights (2,)
                pl.BlockSpec((row_tile, C), lambda i: (i, 0)),        # audio rows
                pl.BlockSpec((row_tile, C), lambda i: (i, 0)),        # text rows
            ],
            out_specs=pl.BlockSpec((row_tile, C), lambda i: (i, 0)),
        ),
        compiler_params=pltpu.CompilerParams(
            dimension_semantics=("parallel",),
            vmem_limit_bytes=_VMEM_LIMIT_BYTES,
        ),
        cost_estimate=cost,
    )(w, a2, t2)

    audio_text_token_encoded = out2.reshape(B, T, C)
    audio_text_token_len = audio_token_len
    return audio_text_token_encoded, audio_text_token_len


def _reference_forward(weights, a, a_len, t, t_len, normalize=True):
    # Pure-JAX reference mirroring the PyTorch module.
    w = jax.nn.softmax(weights.astype(jnp.float32), axis=0).reshape(2, 1, 1, 1)

    def ln(x):
        x = x.astype(jnp.float32)
        mu = jnp.mean(x, axis=-1, keepdims=True)
        var = jnp.mean((x - mu) ** 2, axis=-1, keepdims=True)
        return (x - mu) / jnp.sqrt(var + LN_EPS)

    if normalize:
        stacked = jnp.stack([ln(a), ln(t)], axis=0)
    else:
        stacked = jnp.stack([a.astype(jnp.float32), t.astype(jnp.float32)], axis=0)
    return (w * stacked).sum(axis=0).astype(a.dtype), a_len


if __name__ == "__main__":
    key = jax.random.PRNGKey(0)
    k1, k2, k3, k4 = jax.random.split(key, 4)

    # Deterministic parameter init: weight_init_type='balance' -> [1.0, 1.0]
    weights = jnp.array([1.0, 1.0], dtype=jnp.float32)

    # --- small demo shape (single full-array block path) ---
    B, T, C = 2, 8, 32
    audio = jax.random.normal(k1, (B, T, C), dtype=jnp.float32)
    text = jax.random.normal(k2, (B, T, C), dtype=jnp.float32)
    lengths = jnp.array([8, 6], dtype=jnp.int32)

    out, out_len = weighted_sum_forward(weights, audio, lengths, text, lengths)
    out = jax.block_until_ready(out)

    ref_out, ref_len = _reference_forward(weights, audio, lengths, text, lengths)
    assert out.shape == (B, T, C)
    assert out.dtype == audio.dtype
    assert jnp.allclose(out, ref_out, atol=1e-5, rtol=1e-5)
    assert jnp.array_equal(out_len, lengths)

    # --- tiled path with a partial (masked) last row-tile ---
    B2, T2, C2 = 2, 1050, 256        # rows = 2100 -> grid of 3 x 1024-row tiles
    audio2 = jax.random.normal(k3, (B2, T2, C2), dtype=jnp.float32)
    text2 = jax.random.normal(k4, (B2, T2, C2), dtype=jnp.float32)
    lengths2 = jnp.array([1050, 900], dtype=jnp.int32)

    out2, out2_len = weighted_sum_forward(weights, audio2, lengths2, text2, lengths2)
    out2 = jax.block_until_ready(out2)

    ref_out2, _ = _reference_forward(weights, audio2, lengths2, text2, lengths2)
    assert out2.shape == (B2, T2, C2)
    assert jnp.allclose(out2, ref_out2, atol=1e-5, rtol=1e-5)
    assert jnp.array_equal(out2_len, lengths2)

    print("KERNEL_OK")
</pallas_src>

<mosaic_0001>
module attributes {stable_mosaic.version = 11 : i64} {
  func.func @_weighted_sum_kernel(%arg0: i32, %arg1: memref<2xf32, #tpu.memory_space<smem>>, %arg2: memref<16x32xf32, #tpu.memory_space<vmem>>, %arg3: memref<16x32xf32, #tpu.memory_space<vmem>>, %arg4: memref<16x32xf32, #tpu.memory_space<vmem>>) attributes {dimension_semantics = [#tpu.dimension_semantics<parallel>], iteration_bounds = array<i64: 1>, scalar_prefetch = 0 : i64, scratch_operands = 0 : i64, tpu.core_type = #tpu.core_type<tc>, window_params = [{transform_indices = @transform_0, window_bounds = array<i64: 2>}, {transform_indices = @transform_1, window_bounds = array<i64: 16, 32>}, {transform_indices = @transform_2, window_bounds = array<i64: 16, 32>}, {transform_indices = @transform_3, window_bounds = array<i64: 16, 32>}]} {
    %c0 = arith.constant 0 : index
    %0 = memref.load %arg1[%c0] : memref<2xf32, #tpu.memory_space<smem>>
    %c1 = arith.constant 1 : index
    %1 = memref.load %arg1[%c1] : memref<2xf32, #tpu.memory_space<smem>>
    %c0_0 = arith.constant 0 : index
    %c0_1 = arith.constant 0 : index
    %2 = vector.load %arg2[%c0_0, %c0_1] : memref<16x32xf32, #tpu.memory_space<vmem>>, vector<16x32xf32>
    %c0_2 = arith.constant 0 : index
    %c0_3 = arith.constant 0 : index
    %3 = vector.load %arg3[%c0_2, %c0_3] : memref<16x32xf32, #tpu.memory_space<vmem>>, vector<16x32xf32>
    %cst = arith.constant dense<0.000000e+00> : vector<16xf32>
    %4 = vector.multi_reduction <add>, %2, %cst [1] : vector<16x32xf32> to vector<16xf32>
    %5 = vector.shape_cast %4 : vector<16xf32> to vector<16x1xf32>
    %cst_4 = arith.constant 3.200000e+01 : f32
    %6 = vector.broadcast %cst_4 : f32 to vector<16x1xf32>
    %7 = arith.divf %5, %6 : vector<16x1xf32>
    %8 = vector.broadcast %7 : vector<16x1xf32> to vector<16x32xf32>
    %9 = arith.subf %2, %8 : vector<16x32xf32>
    %10 = arith.mulf %9, %9 : vector<16x32xf32>
    %cst_5 = arith.constant dense<0.000000e+00> : vector<16xf32>
    %11 = vector.multi_reduction <add>, %10, %cst_5 [1] : vector<16x32xf32> to vector<16xf32>
    %12 = vector.shape_cast %11 : vector<16xf32> to vector<16x1xf32>
    %cst_6 = arith.constant 3.200000e+01 : f32
    %13 = vector.broadcast %cst_6 : f32 to vector<16x1xf32>
    %14 = arith.divf %12, %13 : vector<16x1xf32>
    %cst_7 = arith.constant 9.99999974E-6 : f32
    %15 = vector.broadcast %cst_7 : f32 to vector<16x1xf32>
    %16 = arith.addf %14, %15 : vector<16x1xf32>
    %17 = math.rsqrt %16 : vector<16x1xf32>
    %18 = vector.broadcast %17 : vector<16x1xf32> to vector<16x32xf32>
    %19 = arith.mulf %9, %18 : vector<16x32xf32>
    %cst_8 = arith.constant dense<0.000000e+00> : vector<16xf32>
    %20 = vector.multi_reduction <add>, %3, %cst_8 [1] : vector<16x32xf32> to vector<16xf32>
    %21 = vector.shape_cast %20 : vector<16xf32> to vector<16x1xf32>
    %cst_9 = arith.constant 3.200000e+01 : f32
    %22 = vector.broadcast %cst_9 : f32 to vector<16x1xf32>
    %23 = arith.divf %21, %22 : vector<16x1xf32>
    %24 = vector.broadcast %23 : vector<16x1xf32> to vector<16x32xf32>
    %25 = arith.subf %3, %24 : vector<16x32xf32>
    %26 = arith.mulf %25, %25 : vector<16x32xf32>
    %cst_10 = arith.constant dense<0.000000e+00> : vector<16xf32>
    %27 = vector.multi_reduction <add>, %26, %cst_10 [1] : vector<16x32xf32> to vector<16xf32>
    %28 = vector.shape_cast %27 : vector<16xf32> to vector<16x1xf32>
    %cst_11 = arith.constant 3.200000e+01 : f32
    %29 = vector.broadcast %cst_11 : f32 to vector<16x1xf32>
    %30 = arith.divf %28, %29 : vector<16x1xf32>
    %cst_12 = arith.constant 9.99999974E-6 : f32
    %31 = vector.broadcast %cst_12 : f32 to vector<16x1xf32>
    %32 = arith.addf %30, %31 : vector<16x1xf32>
    %33 = math.rsqrt %32 : vector<16x1xf32>
    %34 = vector.broadcast %33 : vector<16x1xf32> to vector<16x32xf32>
    %35 = arith.mulf %25, %34 : vector<16x32xf32>
    %36 = vector.broadcast %0 : f32 to vector<16x32xf32>
    %37 = arith.mulf %36, %19 : vector<16x32xf32>
    %38 = vector.broadcast %1 : f32 to vector<16x32xf32>
    %39 = arith.mulf %38, %35 : vector<16x32xf32>
    %40 = arith.addf %37, %39 : vector<16x32xf32>
    %c0_13 = arith.constant 0 : index
    %c0_14 = arith.constant 0 : index
    %41 = vector.load %arg4[%c0_13, %c0_14] : memref<16x32xf32, #tpu.memory_space<vmem>>, vector<16x32xf32>
    tpu.vector_store %arg4[%c0_13, %c0_14], %40 {strides = array<i32>} : memref<16x32xf32, #tpu.memory_space<vmem>>, vector<16x32xf32>,
    return
  }
  func.func @transform_0(%arg0: i32) -> i32 {
    %c0_i32 = arith.constant 0 : i32
    %c0_i32_0 = arith.constant 0 : i32
    return %c0_i32 : i32
  }
  func.func @transform_1(%arg0: i32) -> (i32, i32) {
    %c0_i32 = arith.constant 0 : i32
    %c0_i32_0 = arith.constant 0 : i32
    return %arg0, %c0_i32 : i32, i32
  }
  func.func @transform_2(%arg0: i32) -> (i32, i32) {
    %c0_i32 = arith.constant 0 : i32
    %c0_i32_0 = arith.constant 0 : i32
    return %arg0, %c0_i32 : i32, i32
  }
  func.func @transform_3(%arg0: i32) -> (i32, i32) {
    %c0_i32 = arith.constant 0 : i32
    %c0_i32_0 = arith.constant 0 : i32
    return %arg0, %c0_i32 : i32, i32
  }
}

</mosaic_0001>

<llo_original>
// kernel: weighted_sum_forward.1
$region0: #{weighted_sum_forward.1}
  #allocation0 [shape = 'u32[]', space=smem, size = 0x4, offset = 0x4, fixed_abs, tag = 'smem constant byte address 0x4 - core index']
  #allocation1 [shape = 'u32[144,128]{1,0:T(1,128)}', space=vmem, size = 0x12000, scoped, tag = 'internal scratch']
  %s0 = inlined_call_operand.vmem [shape: f32[2], index: 0, kind: input, shape index: {}]
  %s1 = inlined_call_operand.vmem [shape: f32[16,32], index: 1, kind: input, shape index: {}]
  %s2 = inlined_call_operand.hbm [shape: f32[16,32], index: 2, kind: input, shape index: {}]
  %s3 = inlined_call_operand.hbm [shape: f32[16,32], index: 3, kind: output, shape index: {}]
  %s4 = sld [smem:[#allocation0]]
  $region30: #{weighted_sum_forward.1} parent=0
    _
  %s6 = ssub.s32 1, %s4
  %s7 = scalar_select 0, %s6, %s4
  $region1: #{weighted_sum_forward.1} parent=0
    #allocation2 [shape = 'u8[512]{0}', space=smem, size = 0x200, scoped, tag = 'input window, operand 0, single buffered']
    #allocation3 [shape = 's32[1]{0}', space=sflag, size = 0x4, scoped, tag = 'scoped memory for weighted_sum_forward.1']
    #allocation4 [shape = 's32[1]{0}', space=sflag, size = 0x4, scoped, tag = 'scoped memory for weighted_sum_forward.1']
    #allocation5 [shape = 's32[1]{0}', space=sflag, size = 0x4, scoped, tag = 'scoped memory for weighted_sum_forward.1']
    #allocation6 [shape = 'u8[8192]{0}', space=vmem, size = 0x2000, scoped, tag = 'input window, operand 2, single buffered']
    #allocation7 [shape = 'u8[8192]{0}', space=vmem, size = 0x2000, scoped, tag = 'output window, operand 0, single buffered']
    %8 = vsyncpa [#allocation5], 0
    %9 = vsyncpa [#allocation3], 0
    %10 = vsyncpa [#allocation4], 0
    // Predicated region
    $region2: #{weighted_sum_forward.1} parent=1 // pred_check
      _
    $region3: #{weighted_sum_forward.1} parent=1 // pred_check_branch
      %12 = sbr.rel (0) target = $region5
    $region4: #{weighted_sum_forward.1} parent=1 // pred_region
      %s14 = ssub.s32 16, 16
      %15 = vsyncadd [#allocation5], %s14
      %s17 = sshll.u32 %s0, 4
      %s18 = int_to_ptr.vmem [resolvable:$true] %s17
      %20 = dma.vmem_to_smem %s18, 16, [#allocation2], [#allocation5]
    $region5: #{weighted_sum_forward.1} parent=1 // pred_fallthru
      _
    // Predicated region
    $region6: #{weighted_sum_forward.1} parent=1 // pred_check
      _
    $region7: #{weighted_sum_forward.1} parent=1 // pred_check_branch
      %22 = sbr.rel (0) target = $region9
    $region8: #{weighted_sum_forward.1} parent=1 // pred_region
      _
    $region9: #{weighted_sum_forward.1} parent=1 // pred_fallthru
      _
    // Predicated region
    $region10: #{weighted_sum_forward.1} parent=1 // pred_check
      _
    $region11: #{weighted_sum_forward.1} parent=1 // pred_check_branch
      %24 = sbr.rel (0) target = $region13
    $region12: #{weighted_sum_forward.1} parent=1 // pred_region
      %s26 = ssub.s32 256, 256
      %27 = vsyncadd [#allocation3], %s26
      %s28 = sshll.u32 [#allocation6], 4
      %s29 = int_to_ptr.vmem [resolvable:$true] %s28
      %34 = dma.hbm_to_vmem [thread:$0]  %s2, 256, %s29, [#allocation3], 128, 128, 8
    $region13: #{weighted_sum_forward.1} parent=1 // pred_fallthru
      _
    // Predicated region
    $region14: #{weighted_sum_forward.1} parent=1 // pred_check
      _
    $region15: #{weighted_sum_forward.1} parent=1 // pred_check_branch
      %36 = sbr.rel (0) target = $region17
    $region16: #{weighted_sum_forward.1} parent=1 // pred_region
      %37 = dma.done [#allocation5], 16
    $region17: #{weighted_sum_forward.1} parent=1 // pred_fallthru
      _
    // Predicated region
    $region18: #{weighted_sum_forward.1} parent=1 // pred_check
      _
    $region19: #{weighted_sum_forward.1} parent=1 // pred_check_branch
      %39 = sbr.rel (0) target = $region21
    $region20: #{weighted_sum_forward.1} parent=1 // pred_region
      %40 = dma.done [#allocation3], 256
    $region21: #{weighted_sum_forward.1} parent=1 // pred_fallthru
      _
    %41 = sfence
    %s42 = sld [smem:[#allocation2]]
    %s43 = sld [smem:[#allocation2 + $0x1]]
    %v44 = vld [vmem:[%s1] sm:$0xff]
    %v45 = vld [vmem:[%s1 + $0x8] sm:$0xff]
    %v46 = vld [vmem:[#allocation6] sm:$0xff]
    %v47 = vld [vmem:[#allocation6 + $0x8] sm:$0xff]
    %vm48 = vcmask 261120
    %v49 = vsel %vm48, %v44, 0.0
    %50 = vadd.xlane.f32.xlu0 %v49
    %v51 = vpop.xlane.xlu0 %50
    %v52 = vsel %vm48, %v45, 0.0
    %53 = vadd.xlane.f32.xlu0 %v52
    %v54 = vpop.xlane.xlu0 %53
    %v55 = vrcp.pop 32.0
    %v56 = vmul.f32 %v51, %v55
    %v57 = vmul.f32 %v54, %v55
    %v58 = vsub.f32 %v44, %v56
    %v59 = vsub.f32 %v45, %v57
    %v60 = vmul.f32 %v58, %v58
    %v61 = vmul.f32 %v59, %v59
    %v62 = vsel %vm48, %v60, 0.0
    %63 = vadd.xlane.f32.xlu0 %v62
    %v64 = vpop.xlane.xlu0 %63
    %v65 = vsel %vm48, %v61, 0.0
    %66 = vadd.xlane.f32.xlu0 %v65
    %v67 = vpop.xlane.xlu0 %66
    %v68 = vmul.f32 %v64, %v55
    %v69 = vmul.f32 %v67, %v55
    %v70 = vadd.f32 %v68, 1e-05
    %v71 = vadd.f32 %v69, 1e-05
    %v72 = vrsqrt.pop %v70
    %v73 = vrsqrt.pop %v71
    %v74 = vmul.f32 %v58, %v72
    %v75 = vmul.f32 %v59, %v73
    %v76 = vsel %vm48, %v46, 0.0
    %77 = vadd.xlane.f32.xlu0 %v76
    %v78 = vpop.xlane.xlu0 %77
    %v79 = vsel %vm48, %v47, 0.0
    %80 = vadd.xlane.f32.xlu0 %v79
    %v81 = vpop.xlane.xlu0 %80
    %v82 = vmul.f32 %v78, %v55
    %v83 = vmul.f32 %v81, %v55
    %v84 = vsub.f32 %v46, %v82
    %v85 = vsub.f32 %v47, %v83
    %v86 = vmul.f32 %v84, %v84
    %v87 = vmul.f32 %v85, %v85
    %v88 = vsel %vm48, %v86, 0.0
    %89 = vadd.xlane.f32.xlu0 %v88
    %v90 = vpop.xlane.xlu0 %89
    %v91 = vsel %vm48, %v87, 0.0
    %92 = vadd.xlane.f32.xlu0 %v91
    %v93 = vpop.xlane.xlu0 %92
    %v94 = vmul.f32 %v90, %v55
    %v95 = vmul.f32 %v93, %v55
    %v96 = vadd.f32 %v94, 1e-05
    %v97 = vadd.f32 %v95, 1e-05
    %v98 = vrsqrt.pop %v96
    %v99 = vrsqrt.pop %v97
    %v100 = vmul.f32 %v84, %v98
    %v101 = vmul.f32 %v85, %v99
    %v102 = vstv %s42
    %v103 = vmul.f32 %v102, %v74
    %v104 = vmul.f32 %v102, %v75
    %v105 = vstv %s43
    %v106 = vmul.f32 %v105, %v100
    %v107 = vmul.f32 %v105, %v101
    %v108 = vadd.f32 %v103, %v106
    %v109 = vadd.f32 %v104, %v107
    %110 = vst.msk [vmem:[#allocation7] sm:$0xff] %vm48, %v108
    %111 = vst.msk [vmem:[#allocation7 + $0x8] sm:$0xff] %vm48, %v109
    // Predicated region
    $region22: #{weighted_sum_forward.1} parent=1 // pred_check
      _
    $region23: #{weighted_sum_forward.1} parent=1 // pred_check_branch
      %113 = sbr.rel (0) target = $region25
    $region24: #{weighted_sum_forward.1} parent=1 // pred_region
      %s115 = ssub.s32 256, 256
      %116 = vsyncadd [#allocation4], %s115
      %s117 = sshll.u32 [#allocation7], 4
      %s118 = int_to_ptr.vmem [resolvable:$true] %s117
      %123 = dma.vmem_to_hbm [thread:$0]  %s118, 256, %s3, [#allocation4], 128, 128, 8
    $region25: #{weighted_sum_forward.1} parent=1 // pred_fallthru
      _
    // Predicated region
    $region26: #{weighted_sum_forward.1} parent=1 // pred_check
      _
    $region27: #{weighted_sum_forward.1} parent=1 // pred_check_branch
      %125 = sbr.rel (0) target = $region29
    $region28: #{weighted_sum_forward.1} parent=1 // pred_region
      %126 = dma.done [#allocation4], 256
    $region29: #{weighted_sum_forward.1} parent=1 // pred_fallthru
      _
    %127 = vsyncpa [#allocation3], 1
    %128 = vsyncpa [#allocation4], 1
    %129 = vsyncpa [#allocation5], 1

</llo_original>
